<compile_context>
chip_gen: v6e
topology: v6e:2x2x1
jax: 0.10.0
libtpu: 0.0.40
codegen_flags: <defaults>
</compile_context>

<pallas_src>
import jax
import jax.numpy as jnp
import numpy as np
from jax.experimental import pallas as pl
from jax.experimental.pallas import tpu as pltpu

NEG_SLOPE = 0.2


def _round_up(x, m):
    return ((x + m - 1) // m) * m


def _round_down(x, m):
    return (x // m) * m


def _leaky_relu(x, slope=NEG_SLOPE):
    # Valid because 0 < slope < 1: max(x, slope*x) == leaky_relu(x).
    return jnp.maximum(x, slope * x)


def discriminator_kernel(z_ref, w1_ref, b1_ref, w2_ref, b2_ref, w3_ref, b3_ref,
                         out_ref):
    # Layer 1: (TB, L) @ (L, 256) -- bf16 operands, f32 accumulation on the MXU.
    h1 = jnp.dot(z_ref[...], w1_ref[...], preferred_element_type=jnp.float32)
    h1 = _leaky_relu(h1 + b1_ref[...])

    # Layer 2: (TB, 256) @ (256, 128).
    h2 = jnp.dot(h1.astype(jnp.bfloat16), w2_ref[...],
                 preferred_element_type=jnp.float32)
    h2 = _leaky_relu(h2 + b2_ref[...])

    # Layer 3 as an NT matmul: (1,128) x (TB,128)^T -> (1, TB).
    # One tiny MXU pass whose output is already lane-dense, so the writeback
    # is a full-width vst instead of TB masked single-lane partial stores.
    row = jax.lax.dot_general(
        w3_ref[...], h2.astype(jnp.bfloat16),
        dimension_numbers=(((1,), (1,)), ((), ())),
        preferred_element_type=jnp.float32)
    row = row + b3_ref[0, 0]

    # Sigmoid: exp + approximate reciprocal both dispatch to the EUP slot.
    val = pl.reciprocal(1.0 + jnp.exp(-row), approx=True)
    out_ref[...] = val.reshape(out_ref.shape).astype(out_ref.dtype)


def _run_tiles(z_bf16, w1, b1, w2, b2, w3, b3, tile):
    """z_bf16: (rows, L) with rows % tile == 0 -> (rows, 1) f32."""
    rows, L = z_bf16.shape
    num_tiles = rows // tile

    def resident(shape):
        # Constant block index: weights/biases stay VMEM-resident across steps.
        return pl.BlockSpec(shape, lambda i: (0,) * len(shape))

    out = pl.pallas_call(
        discriminator_kernel,
        # Lane-dense output: one (1, tile) row per grid step.
        out_shape=jax.ShapeDtypeStruct((num_tiles, 1, tile), jnp.float32),
        grid=(num_tiles,),
        in_specs=[
            pl.BlockSpec((tile, L), lambda i: (i, 0)),            # streamed z
            resident(w1.shape), resident(b1.shape),
            resident(w2.shape), resident(b2.shape),
            resident(w3.shape),
            pl.BlockSpec(memory_space=pltpu.MemorySpace.SMEM),    # b3 scalar
        ],
        out_specs=pl.BlockSpec((1, 1, tile), lambda i: (i, 0, 0)),
        compiler_params=pltpu.CompilerParams(
            dimension_semantics=("parallel",),
            vmem_limit_bytes=32 * 1024 * 1024),
    )(z_bf16, w1, b1, w2, b2, w3, b3)

    # (num_tiles, 1, tile) -> flat row order -> (rows, 1)
    return out.reshape(rows, 1)


def discriminator_forward(z, params, tile_b=2048):
    """z: (B, latent_dim) float -> validity: (B, 1) float32."""
    w1, b1, w2, b2, w3, b3 = params
    B, L = z.shape

    # bf16 operands for the MXU matmuls; biases stay f32.
    z_bf16 = z.astype(jnp.bfloat16)
    w1 = w1.astype(jnp.bfloat16)
    w2 = w2.astype(jnp.bfloat16)
    w3 = w3.astype(jnp.bfloat16)
    b1 = b1.astype(jnp.float32)
    b2 = b2.astype(jnp.float32)
    b3 = b3.astype(jnp.float32)

    # Tile selection:
    #  * >=16 rows (bf16 sublane packing)
    #  * <=4096 so per-step intermediates (~2 KB/row) + double buffers fit
    #    comfortably even on v7x's 64 MiB VMEM (v5e/v6e have 128 MiB)
    #  * <= half the (16-aligned) batch so the grid has >=2 steps and both
    #    v7x TensorCores get work; v5e/v6e are unaffected.
    b16 = _round_up(B, 16)
    two_step_cap = _round_down(b16 // 2, 16)
    tile = max(16, min(_round_up(tile_b, 16), 4096,
                       two_step_cap if two_step_cap > 0 else 16))

    n_full = B // tile
    rem = B - n_full * tile

    outs = []
    if n_full > 0:
        # Tile-divisible prefix streams straight from HBM -- no padded copy.
        outs.append(_run_tiles(z_bf16[:n_full * tile], w1, b1, w2, b2, w3, b3,
                               tile))
    if rem > 0:
        # Only the small tail gets padded (to a multiple of 16 rows).
        tail_rows = _round_up(rem, 16)
        z_tail = jnp.pad(z_bf16[n_full * tile:], ((0, tail_rows - rem), (0, 0)))
        out_tail = _run_tiles(z_tail, w1, b1, w2, b2, w3, b3, tail_rows)
        outs.append(out_tail[:rem])

    return outs[0] if len(outs) == 1 else jnp.concatenate(outs, axis=0)


def init_params(key, latent_dim):
    """Mimics PyTorch nn.Linear default init (U[-1/sqrt(fan_in), 1/sqrt(fan_in)])."""
    dims = [(latent_dim, 256), (256, 128), (128, 1)]
    params = []
    for fan_in, fan_out in dims:
        kw, kb, key = jax.random.split(key, 3)
        bound = 1.0 / np.sqrt(fan_in)
        w = jax.random.uniform(kw, (fan_in, fan_out), jnp.float32, -bound, bound)
        b = jax.random.uniform(kb, (1, fan_out), jnp.float32, -bound, bound)
        params += [w, b]
    w1, b1, w2, b2, w3, b3 = params
    # Last weight stored as (1, 128) so the kernel can do the NT matmul.
    return [w1, b1, w2, b2, w3.reshape(1, 128), b3]


def reference_forward(z, params):
    """Pure-JAX reference mirroring the kernel's bf16 matmul inputs."""
    w1, b1, w2, b2, w3, b3 = params
    h = jnp.dot(z.astype(jnp.bfloat16), w1.astype(jnp.bfloat16),
                preferred_element_type=jnp.float32) + b1
    h = jnp.maximum(h, NEG_SLOPE * h)
    h = jnp.dot(h.astype(jnp.bfloat16), w2.astype(jnp.bfloat16),
                preferred_element_type=jnp.float32) + b2
    h = jnp.maximum(h, NEG_SLOPE * h)
    h = jnp.dot(h.astype(jnp.bfloat16), w3.astype(jnp.bfloat16).T,
                preferred_element_type=jnp.float32) + b3
    return jax.nn.sigmoid(h)


if __name__ == "__main__":
    key = jax.random.PRNGKey(0)
    latent_dim = 32      # stands in for opt.latent_dim
    batch = 300          # not tile-divisible -> exercises prefix (2 grid steps
                         # with the auto-sized tile) plus the padded tail call

    kz, kp = jax.random.split(key)
    z = jax.random.normal(kz, (batch, latent_dim), jnp.float32)
    params = init_params(kp, latent_dim)

    out = discriminator_forward(z, params)   # default tile_b=2048 (auto-capped)
    out = jax.block_until_ready(out)

    ref = reference_forward(z, params)
    assert out.shape == (batch, 1)
    np.testing.assert_allclose(np.asarray(out), np.asarray(ref),
                               rtol=1e-2, atol=1e-2)

    print("KERNEL_OK")
</pallas_src>

<mosaic_0001>
module attributes {stable_mosaic.version = 11 : i64} {
  func.func @discriminator_kernel(%arg0: i32, %arg1: memref<144x32xbf16, #tpu.memory_space<vmem>>, %arg2: memref<32x256xbf16, #tpu.memory_space<vmem>>, %arg3: memref<1x256xf32, #tpu.memory_space<vmem>>, %arg4: memref<256x128xbf16, #tpu.memory_space<vmem>>, %arg5: memref<1x128xf32, #tpu.memory_space<vmem>>, %arg6: memref<1x128xbf16, #tpu.memory_space<vmem>>, %arg7: memref<1x1xf32, #tpu.memory_space<smem>>, %arg8: memref<1x1x144xf32, #tpu.memory_space<vmem>>) attributes {dimension_semantics = [#tpu.dimension_semantics<parallel>], iteration_bounds = array<i64: 2>, scalar_prefetch = 0 : i64, scratch_operands = 0 : i64, tpu.core_type = #tpu.core_type<tc>, window_params = [{transform_indices = @transform_0, window_bounds = array<i64: 144, 32>}, {pipeline_mode = #tpu.pipeline_mode<synchronous>, transform_indices = @transform_1, window_bounds = array<i64: 32, 256>}, {pipeline_mode = #tpu.pipeline_mode<synchronous>, transform_indices = @transform_2, window_bounds = array<i64: 1, 256>}, {pipeline_mode = #tpu.pipeline_mode<synchronous>, transform_indices = @transform_3, window_bounds = array<i64: 256, 128>}, {pipeline_mode = #tpu.pipeline_mode<synchronous>, transform_indices = @transform_4, window_bounds = array<i64: 1, 128>}, {pipeline_mode = #tpu.pipeline_mode<synchronous>, transform_indices = @transform_5, window_bounds = array<i64: 1, 128>}, {transform_indices = @transform_6, window_bounds = array<i64: 1, 1>}, {transform_indices = @transform_7, window_bounds = array<i64: 1, 1, 144>}]} {
    %c0 = arith.constant 0 : index
    %c0_0 = arith.constant 0 : index
    %0 = vector.load %arg1[%c0, %c0_0] : memref<144x32xbf16, #tpu.memory_space<vmem>>, vector<144x32xbf16>
    %c0_1 = arith.constant 0 : index
    %c0_2 = arith.constant 0 : index
    %1 = vector.load %arg2[%c0_1, %c0_2] : memref<32x256xbf16, #tpu.memory_space<vmem>>, vector<32x256xbf16>
    %cst = arith.constant dense<0.000000e+00> : vector<144x256xf32>
    %2 = tpu.matmul %0, %1, %cst {dimension_numbers = #tpu.dot_dimension_numbers<[1], [0], [0], [1], [0, 0, 1, 1], [], []>} : vector<144x32xbf16>, vector<32x256xbf16>, vector<144x256xf32> -> vector<144x256xf32>
    %c0_3 = arith.constant 0 : index
    %c0_4 = arith.constant 0 : index
    %3 = vector.load %arg3[%c0_3, %c0_4] : memref<1x256xf32, #tpu.memory_space<vmem>>, vector<1x256xf32>
    %4 = vector.broadcast %3 : vector<1x256xf32> to vector<144x256xf32>
    %5 = arith.addf %2, %4 : vector<144x256xf32>
    %cst_5 = arith.constant 2.000000e-01 : f32
    %6 = vector.broadcast %cst_5 : f32 to vector<144x256xf32>
    %7 = arith.mulf %6, %5 : vector<144x256xf32>
    %8 = arith.maximumf %5, %7 : vector<144x256xf32>
    %9 = arith.truncf %8 : vector<144x256xf32> to vector<144x256xbf16>
    %c0_6 = arith.constant 0 : index
    %c0_7 = arith.constant 0 : index
    %10 = vector.load %arg4[%c0_6, %c0_7] : memref<256x128xbf16, #tpu.memory_space<vmem>>, vector<256x128xbf16>
    %cst_8 = arith.constant dense<0.000000e+00> : vector<144x128xf32>
    %11 = tpu.matmul %9, %10, %cst_8 {dimension_numbers = #tpu.dot_dimension_numbers<[1], [0], [0], [1], [0, 0, 1, 1], [], []>} : vector<144x256xbf16>, vector<256x128xbf16>, vector<144x128xf32> -> vector<144x128xf32>
    %c0_9 = arith.constant 0 : index
    %c0_10 = arith.constant 0 : index
    %12 = vector.load %arg5[%c0_9, %c0_10] : memref<1x128xf32, #tpu.memory_space<vmem>>, vector<1x128xf32>
    %13 = vector.broadcast %12 : vector<1x128xf32> to vector<144x128xf32>
    %14 = arith.addf %11, %13 : vector<144x128xf32>
    %cst_11 = arith.constant 2.000000e-01 : f32
    %15 = vector.broadcast %cst_11 : f32 to vector<144x128xf32>
    %16 = arith.mulf %15, %14 : vector<144x128xf32>
    %17 = arith.maximumf %14, %16 : vector<144x128xf32>
    %c0_12 = arith.constant 0 : index
    %c0_13 = arith.constant 0 : index
    %18 = vector.load %arg6[%c0_12, %c0_13] : memref<1x128xbf16, #tpu.memory_space<vmem>>, vector<1x128xbf16>
    %19 = arith.truncf %17 : vector<144x128xf32> to vector<144x128xbf16>
    %cst_14 = arith.constant dense<0.000000e+00> : vector<1x144xf32>
    %20 = tpu.matmul %18, %19, %cst_14 {dimension_numbers = #tpu.dot_dimension_numbers<[1], [1], [0], [0], [0, 0, 1, 0], [], []>} : vector<1x128xbf16>, vector<144x128xbf16>, vector<1x144xf32> -> vector<1x144xf32>
    %c0_15 = arith.constant 0 : index
    %c0_16 = arith.constant 0 : index
    %21 = memref.load %arg7[%c0_15, %c0_16] : memref<1x1xf32, #tpu.memory_space<smem>>
    %22 = vector.broadcast %21 : f32 to vector<1x144xf32>
    %23 = arith.addf %20, %22 : vector<1x144xf32>
    %cst_17 = arith.constant 0.000000e+00 : f32
    %24 = vector.broadcast %cst_17 : f32 to vector<1x144xf32>
    %25 = arith.subf %24, %23 : vector<1x144xf32>
    %26 = math.exp %25 : vector<1x144xf32>
    %cst_18 = arith.constant 1.000000e+00 : f32
    %27 = vector.broadcast %cst_18 : f32 to vector<1x144xf32>
    %28 = arith.addf %27, %26 : vector<1x144xf32>
    %29 = tpu.reciprocal %28 {approx = true} : vector<1x144xf32> -> vector<1x144xf32>
    %30 = vector.shape_cast %29 : vector<1x144xf32> to vector<1x1x144xf32>
    %c0_19 = arith.constant 0 : index
    %c0_20 = arith.constant 0 : index
    %c0_21 = arith.constant 0 : index
    %31 = vector.load %arg8[%c0_19, %c0_20, %c0_21] : memref<1x1x144xf32, #tpu.memory_space<vmem>>, vector<1x1x144xf32>
    tpu.vector_store %arg8[%c0_19, %c0_20, %c0_21], %30 {strides = array<i32>} : memref<1x1x144xf32, #tpu.memory_space<vmem>>, vector<1x1x144xf32>,
    return
  }
  func.func @transform_0(%arg0: i32) -> (i32, i32) {
    %c0_i32 = arith.constant 0 : i32
    %c0_i32_0 = arith.constant 0 : i32
    return %arg0, %c0_i32 : i32, i32
  }
  func.func @transform_1(%arg0: i32) -> (i32, i32) {
    %c0_i32 = arith.constant 0 : i32
    %c0_i32_0 = arith.constant 0 : i32
    %c0_i32_1 = arith.constant 0 : i32
    return %c0_i32, %c0_i32_0 : i32, i32
  }
  func.func @transform_2(%arg0: i32) -> (i32, i32) {
    %c0_i32 = arith.constant 0 : i32
    %c0_i32_0 = arith.constant 0 : i32
    %c0_i32_1 = arith.constant 0 : i32
    return %c0_i32, %c0_i32_0 : i32, i32
  }
  func.func @transform_3(%arg0: i32) -> (i32, i32) {
    %c0_i32 = arith.constant 0 : i32
    %c0_i32_0 = arith.constant 0 : i32
    %c0_i32_1 = arith.constant 0 : i32
    return %c0_i32, %c0_i32_0 : i32, i32
  }
  func.func @transform_4(%arg0: i32) -> (i32, i32) {
    %c0_i32 = arith.constant 0 : i32
    %c0_i32_0 = arith.constant 0 : i32
    %c0_i32_1 = arith.constant 0 : i32
    return %c0_i32, %c0_i32_0 : i32, i32
  }
  func.func @transform_5(%arg0: i32) -> (i32, i32) {
    %c0_i32 = arith.constant 0 : i32
    %c0_i32_0 = arith.constant 0 : i32
    %c0_i32_1 = arith.constant 0 : i32
    return %c0_i32, %c0_i32_0 : i32, i32
  }
  func.func @transform_6(%arg0: i32) -> (i32, i32) {
    %c0_i32 = arith.constant 0 : i32
    %c0_i32_0 = arith.constant 0 : i32
    %c0_i32_1 = arith.constant 0 : i32
    return %c0_i32, %c0_i32_0 : i32, i32
  }
  func.func @transform_7(%arg0: i32) -> (i32, i32, i32) {
    %c0_i32 = arith.constant 0 : i32
    %c0_i32_0 = arith.constant 0 : i32
    %c0_i32_1 = arith.constant 0 : i32
    return %arg0, %c0_i32, %c0_i32_0 : i32, i32, i32
  }
}

</mosaic_0001>

<llo_original>
// kernel: tpu_custom_call.1
$region0: #{tpu_custom_call.1}
  #allocation0 [shape = 'u32[]', space=smem, size = 0x4, offset = 0x4, fixed_abs, tag = 'smem constant byte address 0x4 - core index']
  #allocation1 [shape = 'u32[144,128]{1,0:T(1,128)}', space=vmem, size = 0x12000, scoped, tag = 'internal scratch']
  #allocation2 [shape = 'f32[1,1]{1,0:T(1,128)S(6)}', space=smem, size = 0x200, scoped, tag = 'scoped memory for tpu_custom_call.1']
  %s0 = inlined_call_operand.vmem [shape: bf16[288,32], index: 0, kind: input, shape index: {}]
  %s1 = inlined_call_operand.vmem [shape: bf16[32,256], index: 1, kind: input, shape index: {}]
  %s2 = inlined_call_operand.vmem [shape: f32[1,256], index: 2, kind: input, shape index: {}]
  %s3 = inlined_call_operand.vmem [shape: bf16[256,128], index: 3, kind: input, shape index: {}]
  %s4 = inlined_call_operand.vmem [shape: f32[1,128], index: 4, kind: input, shape index: {}]
  %s5 = inlined_call_operand.vmem [shape: bf16[1,128], index: 5, kind: input, shape index: {}]
  %s6 = inlined_call_operand.<no memory space> [shape: f32[1,1], index: 6, kind: input, shape index: {}]
  %s7 = inlined_call_operand.hbm [shape: f32[2,1,144], index: 7, kind: output, shape index: {}]
  %s8 = sld [smem:[#allocation0]]
  $region61: #{tpu_custom_call.1} parent=0
    _
  %s10 = ssub.s32 1, %s8
  %s11 = scalar_select 0, %s10, %s8
  %12 = sst [smem:[#allocation2]] %s6
  $region1: #{tpu_custom_call.1} parent=0
    #allocation3 [shape = 'u8[2048]{0}', space=vmem, size = 0x800, scoped, tag = 'output window, operand 0']
    #allocation4 [shape = 's32[2]{0}', space=sflag, size = 0x8, scoped, tag = 'scoped memory for tpu_custom_call.1']
    %13 = vsyncpa [#allocation4], 0
    %s14 = scalar_lea.sflag [#allocation4], 1
    %15 = vsyncpa %s14, 0
    loop: start=0, step=1, limit=4
    $region2: #{tpu_custom_call.1} parent=1 // loop_pre_header
      _
    $region3: #{tpu_custom_call.1} parent=1 // loop_header
      %s17 = sphi 0, %s21
      %p18 = scmp.ge.s32.totalorder %s17, 4
      %s27 = sphi 0, %s29
      %s30 = sphi 0, %s27
      %s31 = sphi 0, %s30
      %s47 = sphi 0, %s31
      %s51 = sphi 0, %s51
      %s53 = sphi 0, %s51
      %s54 = sphi 0, %s53
      %s68 = sphi 0, %s54
      %s72 = sphi 0, %s72
      %s74 = sphi 0, %s72
      %s75 = sphi 0, %s74
      %s89 = sphi 0, %s75
      %s93 = sphi 0, %s93
      %s95 = sphi 0, %s93
      %s96 = sphi 0, %s95
      %s110 = sphi 0, %s96
      %s114 = sphi 0, %s114
      %s116 = sphi 0, %s114
      %s117 = sphi 0, %s116
      %s131 = sphi 0, %s117
      %s135 = sphi 0, %s135
      %s137 = sphi 0, %s135
      %s138 = sphi 0, %s137
      %s152 = sphi 0, %s138
      %s156 = sphi 0, %s156
      %s158 = sphi 0, %s156
      %s159 = sphi 0, %s158
      %s173 = sphi 0, %s159
      %s179 = sphi 0, %s181
      %s182 = sphi 0, %s179
      %s183 = sphi 0, %s182
      %s199 = sphi 0, %s183
    $region4: #{tpu_custom_call.1} parent=1 // loop_header_branch
      %20 = sbr.rel (%p18) target = $region8
    $region5: #{tpu_custom_call.1} parent=1 // loop_body
      %s22 = ssub.s32 %s17, 1
      %s23 = ssub.s32 %s17, 2
      %s24 = sadd.s32 %s17, 1
      %s25 = ssub.s32 %s17, %s24
      %p26 = scmp.eq.s32.totalorder %s25, 0
      %s28 = sadd.s32 %s27, 1
      %s29 = scalar_select %p26, %s27, %s28
      %p32 = pneg %p26
      %p33 = scmp.eq.s32.totalorder %s17, 1
      %p34 = por %p32, %p33
      %p35 = scmp.ne.s32.totalorder %s27, %s30
      %p36 = scmp.eq.s32.totalorder %s17, 0
      %p37 = por %p35, %p36
      %p38 = scmp.ne.s32.totalorder %s27, %s30
      %p39 = scmp.eq.s32.totalorder %s22, 1
      %p40 = por %p38, %p39
      %p41 = scmp.ne.s32.totalorder %s30, %s31
      %p42 = scmp.eq.s32.totalorder %s22, 0
      %p43 = por %p41, %p42
      %p44 = scmp.ne.s32.totalorder %s30, %s31
      %p45 = scmp.eq.s32.totalorder %s23, 1
      %p46 = por %p44, %p45
      %p48 = scmp.ne.s32.totalorder %s31, %s47
      %p49 = scmp.eq.s32.totalorder %s23, 0
      %p50 = por %p48, %p49
      %s52 = sadd.s32 %s51, 1
      %p55 = scmp.eq.s32.totalorder %s17, 1
      %p56 = scmp.ne.s32.totalorder %s51, %s53
      %p57 = scmp.eq.s32.totalorder %s17, 0
      %p58 = por %p56, %p57
      %p59 = scmp.ne.s32.totalorder %s51, %s53
      %p60 = scmp.eq.s32.totalorder %s22, 1
      %p61 = por %p59, %p60
      %p62 = scmp.ne.s32.totalorder %s53, %s54
      %p63 = scmp.eq.s32.totalorder %s22, 0
      %p64 = por %p62, %p63
      %p65 = scmp.ne.s32.totalorder %s53, %s54
      %p66 = scmp.eq.s32.totalorder %s23, 1
      %p67 = por %p65, %p66
      %p69 = scmp.ne.s32.totalorder %s54, %s68
      %p70 = scmp.eq.s32.totalorder %s23, 0
      %p71 = por %p69, %p70
      %s73 = sadd.s32 %s72, 1
      %p76 = scmp.eq.s32.totalorder %s17, 1
      %p77 = scmp.ne.s32.totalorder %s72, %s74
      %p78 = scmp.eq.s32.totalorder %s17, 0
      %p79 = por %p77, %p78
      %p80 = scmp.ne.s32.totalorder %s72, %s74
      %p81 = scmp.eq.s32.totalorder %s22, 1
      %p82 = por %p80, %p81
      %p83 = scmp.ne.s32.totalorder %s74, %s75
      %p84 = scmp.eq.s32.totalorder %s22, 0
      %p85 = por %p83, %p84
      %p86 = scmp.ne.s32.totalorder %s74, %s75
      %p87 = scmp.eq.s32.totalorder %s23, 1
      %p88 = por %p86, %p87
      %p90 = scmp.ne.s32.totalorder %s75, %s89
      %p91 = scmp.eq.s32.totalorder %s23, 0
      %p92 = por %p90, %p91
      %s94 = sadd.s32 %s93, 1
      %p97 = scmp.eq.s32.totalorder %s17, 1
      %p98 = scmp.ne.s32.totalorder %s93, %s95
      %p99 = scmp.eq.s32.totalorder %s17, 0
      %p100 = por %p98, %p99
      %p101 = scmp.ne.s32.totalorder %s93, %s95
      %p102 = scmp.eq.s32.totalorder %s22, 1
      %p103 = por %p101, %p102
      %p104 = scmp.ne.s32.totalorder %s95, %s96
      %p105 = scmp.eq.s32.totalorder %s22, 0
      %p106 = por %p104, %p105
      %p107 = scmp.ne.s32.totalorder %s95, %s96
      %p108 = scmp.eq.s32.totalorder %s23, 1
      %p109 = por %p107, %p108
      %p111 = scmp.ne.s32.totalorder %s96, %s110
      %p112 = scmp.eq.s32.totalorder %s23, 0
      %p113 = por %p111, %p112
      %s115 = sadd.s32 %s114, 1
      %p118 = scmp.eq.s32.totalorder %s17, 1
      %p119 = scmp.ne.s32.totalorder %s114, %s116
      %p120 = scmp.eq.s32.totalorder %s17, 0
      %p121 = por %p119, %p120
      %p122 = scmp.ne.s32.totalorder %s114, %s116
      %p123 = scmp.eq.s32.totalorder %s22, 1
      %p124 = por %p122, %p123
      %p125 = scmp.ne.s32.totalorder %s116, %s117
      %p126 = scmp.eq.s32.totalorder %s22, 0
      %p127 = por %p125, %p126
      %p128 = scmp.ne.s32.totalorder %s116, %s117
      %p129 = scmp.eq.s32.totalorder %s23, 1
      %p130 = por %p128, %p129
      %p132 = scmp.ne.s32.totalorder %s117, %s131
      %p133 = scmp.eq.s32.totalorder %s23, 0
      %p134 = por %p132, %p133
      %s136 = sadd.s32 %s135, 1
      %p139 = scmp.eq.s32.totalorder %s17, 1
      %p140 = scmp.ne.s32.totalorder %s135, %s137
      %p141 = scmp.eq.s32.totalorder %s17, 0
      %p142 = por %p140, %p141
      %p143 = scmp.ne.s32.totalorder %s135, %s137
      %p144 = scmp.eq.s32.totalorder %s22, 1
      %p145 = por %p143, %p144
      %p146 = scmp.ne.s32.totalorder %s137, %s138
      %p147 = scmp.eq.s32.totalorder %s22, 0
      %p148 = por %p146, %p147
      %p149 = scmp.ne.s32.totalorder %s137, %s138
      %p150 = scmp.eq.s32.totalorder %s23, 1
      %p151 = por %p149, %p150
      %p153 = scmp.ne.s32.totalorder %s138, %s152
      %p154 = scmp.eq.s32.totalorder %s23, 0
      %p155 = por %p153, %p154
      %s157 = sadd.s32 %s156, 1
      %p160 = scmp.eq.s32.totalorder %s17, 1
      %p161 = scmp.ne.s32.totalorder %s156, %s158
      %p162 = scmp.eq.s32.totalorder %s17, 0
      %p163 = por %p161, %p162
      %p164 = scmp.ne.s32.totalorder %s156, %s158
      %p165 = scmp.eq.s32.totalorder %s22, 1
      %p166 = por %p164, %p165
      %p167 = scmp.ne.s32.totalorder %s158, %s159
      %p168 = scmp.eq.s32.totalorder %s22, 0
      %p169 = por %p167, %p168
      %p170 = scmp.ne.s32.totalorder %s158, %s159
      %p171 = scmp.eq.s32.totalorder %s23, 1
      %p172 = por %p170, %p171
      %p174 = scmp.ne.s32.totalorder %s159, %s173
      %p175 = scmp.eq.s32.totalorder %s23, 0
      %p176 = por %p174, %p175
      %s177 = ssub.s32 %s17, %s24
      %p178 = scmp.eq.s32.totalorder %s177, 0
      %s180 = sadd.s32 %s179, 1
      %s181 = scalar_select %p178, %s179, %s180
      %p184 = pneg %p178
      %p185 = scmp.eq.s32.totalorder %s17, 1
      %p186 = por %p184, %p185
      %p187 = scmp.ne.s32.totalorder %s179, %s182
      %p188 = scmp.eq.s32.totalorder %s17, 0
      %p189 = por %p187, %p188
      %p190 = scmp.ne.s32.totalorder %s179, %s182
      %p191 = scmp.eq.s32.totalorder %s22, 1
      %p192 = por %p190, %p191
      %p193 = scmp.ne.s32.totalorder %s182, %s183
      %p194 = scmp.eq.s32.totalorder %s22, 0
      %p195 = por %p193, %p194
      %p196 = scmp.ne.s32.totalorder %s182, %s183
      %p197 = scmp.eq.s32.totalorder %s23, 1
      %p198 = por %p196, %p197
      %p200 = scmp.ne.s32.totalorder %s183, %s199
      %p201 = scmp.eq.s32.totalorder %s23, 0
      %p202 = por %p200, %p201
      %p203 = scmp.le.s32.totalorder 1, %s17
      %p204 = scmp.lt.s32.totalorder %s17, 3
      %p205 = pnand %p203, %p204
      %p206 = pneg %p205
      // Predicated region
      $region9: #{tpu_custom_call.1} parent=5 // pred_check
        _
      $region10: #{tpu_custom_call.1} parent=5 // pred_check_branch
        %208 = sbr.rel (%p205) target = $region12
      $region11: #{tpu_custom_call.1} parent=5 // pred_region
        %s209 = ssub.s32 %s17, 1
        // Predicated region
        $region13: #{tpu_custom_call.1} parent=11 // pred_check
          %p210 = pneg %p64
        $region14: #{tpu_custom_call.1} parent=11 // pred_check_branch
          %212 = sbr.rel (%p210) target = $region16
        $region15: #{tpu_custom_call.1} parent=11 // pred_region
          _
        $region16: #{tpu_custom_call.1} parent=11 // pred_fallthru
          _
        // Predicated region
        $region17: #{tpu_custom_call.1} parent=11 // pred_check
          %p213 = pneg %p85
        $region18: #{tpu_custom_call.1} parent=11 // pred_check_branch
          %215 = sbr.rel (%p213) target = $region20
        $region19: #{tpu_custom_call.1} parent=11 // pred_region
          _
        $region20: #{tpu_custom_call.1} parent=11 // pred_fallthru
          _
        // Predicated region
        $region21: #{tpu_custom_call.1} parent=11 // pred_check
          %p216 = pneg %p106
        $region22: #{tpu_custom_call.1} parent=11 // pred_check_branch
          %218 = sbr.rel (%p216) target = $region24
        $region23: #{tpu_custom_call.1} parent=11 // pred_region
          _
        $region24: #{tpu_custom_call.1} parent=11 // pred_fallthru
          _
        // Predicated region
        $region25: #{tpu_custom_call.1} parent=11 // pred_check
          %p219 = pneg %p127
        $region26: #{tpu_custom_call.1} parent=11 // pred_check_branch
          %221 = sbr.rel (%p219) target = $region28
        $region27: #{tpu_custom_call.1} parent=11 // pred_region
          _
        $region28: #{tpu_custom_call.1} parent=11 // pred_fallthru
          _
        // Predicated region
        $region29: #{tpu_custom_call.1} parent=11 // pred_check
          %p222 = pneg %p148
        $region30: #{tpu_custom_call.1} parent=11 // pred_check_branch
          %224 = sbr.rel (%p222) target = $region32
        $region31: #{tpu_custom_call.1} parent=11 // pred_region
          _
        $region32: #{tpu_custom_call.1} parent=11 // pred_fallthru
          _
        // Predicated region
        $region33: #{tpu_custom_call.1} parent=11 // pred_check
          %p225 = pneg %p169
        $region34: #{tpu_custom_call.1} parent=11 // pred_check_branch
          %227 = sbr.rel (%p225) target = $region36
        $region35: #{tpu_custom_call.1} parent=11 // pred_region
          _
        $region36: #{tpu_custom_call.1} parent=11 // pred_fallthru
          _
      $region12: #{tpu_custom_call.1} parent=5 // pred_fallthru
        _
      %p228 = scmp.lt.s32.totalorder %s17, 2
      // Predicated region
      $region37: #{tpu_custom_call.1} parent=5 // pred_check
        %p229 = pneg %p228
      $region38: #{tpu_custom_call.1} parent=5 // pred_check_branch
        %231 = sbr.rel (%p229) target = $region40
      $region39: #{tpu_custom_call.1} parent=5 // pred_region
        // Predicated region
        $region41: #{tpu_custom_call.1} parent=39 // pred_check
          %p232 = pneg %p37
        $region42: #{tpu_custom_call.1} parent=39 // pred_check_branch
          %234 = sbr.rel (%p232) target = $region44
        $region43: #{tpu_custom_call.1} parent=39 // pred_region
          %s235 = smul.u32 18, %s17
          %p236 = scmp.lt.s32.totalorder %s235, 35
          %s237 = scalar_select %p236, %s235, 35
          %s238 = smul.addr %s237, 4
          %s239 = scalar_lea.vmem %s0, %s238
          %s240 = smul.u32 18, %s17
        $region44: #{tpu_custom_call.1} parent=39 // pred_fallthru
          _
      $region40: #{tpu_custom_call.1} parent=5 // pred_fallthru
        _
      %p241 = scmp.le.s32.totalorder 1, %s17
      %p242 = scmp.lt.s32.totalorder %s17, 3
      %p243 = pnand %p241, %p242
      %p244 = pneg %p243
      // Predicated region
      $region45: #{tpu_custom_call.1} parent=5 // pred_check
        _
      $region46: #{tpu_custom_call.1} parent=5 // pred_check_branch
        %246 = sbr.rel (%p243) target = $region48
      $region47: #{tpu_custom_call.1} parent=5 // pred_region
        %s247 = ssub.s32 %s17, 1
        %s248 = smul.u32 18, %s22
        %p249 = scmp.lt.s32.totalorder %s248, 35
        %s250 = scalar_select %p249, %s248, 35
        %s251 = smul.addr %s250, 4
        %s252 = scalar_lea.vmem %s0, %s251
        %p253 = pneg %p43
        %p254 = pneg %p40
        %p255 = pneg %p64
        %p256 = pneg %p61
        %p257 = pneg %p85
        %p258 = pneg %p82
        %p259 = pneg %p106
        %p260 = pneg %p103
        %p261 = pneg %p127
        %p262 = pneg %p124
        %p263 = pneg %p148
        %p264 = pneg %p145
        %p265 = pneg %p169
        %p266 = pneg %p166
        %p267 = pneg %p195
        %p268 = pneg %p192
        %s269 = sand.u32 %s182, 1
        %s270 = scalar_lea.sflag [#allocation4], %s269
        %s271 = sand.u32 %s182, 1
        %s272 = smul.addr %s271, 2
        %s273 = scalar_lea.vmem [#allocation3], %s272
        %s274 = smul.u32 18, %s22
        %p275 = scmp.lt.s32.totalorder %s274, 35
        %s276 = scalar_select %p275, %s274, 35
        %s277 = smul.addr %s276, 4
        %s278 = scalar_lea.vmem %s0, %s277
        %s279 = smul.u32 18, %s22
        %v281 = vld [vmem:[%s278] sm:$0xf]
        %v282 = vld [vmem:[%s278 + $0x4] sm:$0xf]
        %v283 = vld [vmem:[%s278 + $0x8] sm:$0xf]
        %v284 = vld [vmem:[%s278 + $0xc] sm:$0xf]
        %v285 = vld [vmem:[%s278 + $0x10] sm:$0xf]
        %v286 = vld [vmem:[%s278 + $0x14] sm:$0xf]
        %v287 = vld [vmem:[%s278 + $0x18] sm:$0xf]
        %v288 = vld [vmem:[%s278 + $0x1c] sm:$0xf]
        %v289 = vld [vmem:[%s278 + $0x20] sm:$0xf]
        %v290 = vld [vmem:[%s278 + $0x24] sm:$0xf]
        %v291 = vld [vmem:[%s278 + $0x28] sm:$0xf]
        %v292 = vld [vmem:[%s278 + $0x2c] sm:$0xf]
        %v293 = vld [vmem:[%s278 + $0x30] sm:$0xf]
        %v294 = vld [vmem:[%s278 + $0x34] sm:$0xf]
        %v295 = vld [vmem:[%s278 + $0x38] sm:$0xf]
        %v296 = vld [vmem:[%s278 + $0x3c] sm:$0xf]
        %v297 = vld [vmem:[%s278 + $0x40] sm:$0xf]
        %v298 = vld [vmem:[%s278 + $0x44] sm:$0xf]
        %v299 = vld [vmem:[%s1] sm:$0xff]
        %v300 = vld [vmem:[%s1 + $0x8] sm:$0xff]
        %v301 = vld [vmem:[%s1 + $0x10] sm:$0xff]
        %v302 = vld [vmem:[%s1 + $0x18] sm:$0xff]
        %v303 = vld [vmem:[%s2] sm:$0x3]
        %v305 = vlaneseq
        %v306 = vshrl.u32 %v305, 7
        %v307 = vsub.s32 0, %v306
        %v308 = vrot.slane %v303, %v307
        %v309 = vlaneseq
        %v310 = vshrl.u32 %v309, 7
        %v311 = vsub.s32 1, %v310
        %v312 = vrot.slane %v303, %v311
        %v333 = vunpack.c.l.b16 %v281
        %v334 = vunpack.c.l.b16 %v282
        %v335 = vunpack.c.l.b16 %v283
        %v336 = vunpack.c.l.b16 %v284
        %v337 = vunpack.c.l.b16 %v285
        %v338 = vunpack.c.l.b16 %v286
        %v339 = vunpack.c.l.b16 %v287
        %v340 = vunpack.c.l.b16 %v288
        %v341 = vunpack.c.l.b16 %v289
        %v342 = vunpack.c.l.b16 %v290
        %v343 = vunpack.c.l.b16 %v291
        %v344 = vunpack.c.l.b16 %v292
        %v345 = vunpack.c.l.b16 %v293
        %v346 = vunpack.c.l.b16 %v294
        %v347 = vunpack.c.l.b16 %v295
        %v348 = vunpack.c.l.b16 %v296
        %v349 = vunpack.c.l.b16 %v297
        %v350 = vunpack.c.l.b16 %v298
        %v351 = vpack.c.b16 %v334, %v333
        %v352 = vpack.c.b16 %v336, %v335
        %v353 = vpack.c.b16 %v338, %v337
        %v354 = vpack.c.b16 %v340, %v339
        %v355 = vpack.c.b16 %v342, %v341
        %v356 = vpack.c.b16 %v344, %v343
        %v357 = vpack.c.b16 %v346, %v345
        %v358 = vpack.c.b16 %v348, %v347
        %v359 = vpack.c.b16 %v350, %v349
        %v364 = vunpack.c.l.b16 %v299
        %v365 = vunpack.c.h.b16 %v299
        %v366 = vunpack.c.l.b16 %v300
        %v367 = vunpack.c.h.b16 %v300
        %v368 = vunpack.c.l.b16 %v301
        %v369 = vunpack.c.h.b16 %v301
        %v370 = vunpack.c.l.b16 %v302
        %v371 = vunpack.c.h.b16 %v302
        %v372 = vpack.c.b16 %v366, %v364
        %v373 = vpack.c.b16 %v367, %v365
        %v374 = vpack.c.b16 %v370, %v368
        %v375 = vpack.c.b16 %v371, %v369
        %vm380 = vcmask 261120
        %v382 = vsel %vm380, %v351, 0
        %v385 = vsel %vm380, %v352, 0
        %v388 = vsel %vm380, %v353, 0
        %v391 = vsel %vm380, %v354, 0
        %v394 = vsel %vm380, %v355, 0
        %v397 = vsel %vm380, %v356, 0
        %v400 = vsel %vm380, %v357, 0
        %v403 = vsel %vm380, %v358, 0
        %v406 = vsel %vm380, %v359, 0
        %408 = vmatprep.subr.bf16.mxu0 0
        %409 = vmatpush1.bf16.msra.mxu0 0
        %410 = vmatprep.subr.bf16.mxu0 0
        %411 = vmatpush1.bf16.msra.mxu0 0
        %412 = vmatprep.subr.bf16.mxu0 0
        %413 = vmatpush1.bf16.msra.mxu0 0
        %414 = vmatprep.subr.bf16.mxu0 0
        %415 = vmatpush1.bf16.msra.mxu0 0
        %416 = vmatprep.subr.bf16.mxu0 0
        %417 = vmatpush1.bf16.msra.mxu0 0
        %418 = vmatprep.subr.bf16.mxu0 0
        %419 = vmatpush1.bf16.msra.mxu0 0
        %420 = vmatprep.subr.bf16.mxu0 %v375
        %421 = vmatpush1.bf16.msra.mxu0 %v374
        %422 = vmatprep.subr.bf16.mxu0 %v373
        %423 = vmatpush1.bf16.msra.mxu0 %v372
        %424 = vmatprep.subr.bf16.mxu0 0
        %425 = vmatpush2.bf16.msra.mxu0 0
        %426 = vmatprep.subr.bf16.mxu0 0
        %427 = vmatpush2.bf16.msra.mxu0 0
        %428 = vmatprep.subr.bf16.mxu0 0
        %429 = vmatpush2.bf16.msra.mxu0 0
        %430 = vmatprep.subr.bf16.mxu0 0
        %431 = vmatpush2.bf16.msra.mxu0 0
        %432 = vmatprep.subr.bf16.mxu0 0
        %433 = vmatpush2.bf16.msra.mxu0 0
        %434 = vmatprep.subr.bf16.mxu0 0
        %435 = vmatpush2.bf16.msra.mxu0 0
        %436 = vmatprep.subr.bf16.mxu0 0
        %437 = vmatpush2.bf16.msra.mxu0 0
        %438 = vmatprep.subr.bf16.mxu0 0
        %439 = vmatpush2.bf16.msra.mxu0 0
        %440 = vmatprep.mubr.bf16.mxu0 0
        %441 = vmatmul.mubr.bf16.gmra.mxu0 %v382
        %v442 = vpop.f32.mrf.mxu0
        %v443 = vadd.f32 %v308, %v442
        %v444 = vpop.f32.mrf.mxu0
        %v445 = vadd.f32 %v312, %v444
        %v446 = vpop.f32.mrf.mxu0
        %v447 = vadd.f32 %v308, %v446
        %v448 = vpop.f32.mrf.mxu0
        %v449 = vadd.f32 %v312, %v448
        %450 = vmatprep.mubr.bf16.mxu0 0
        %451 = vmatmul.mubr.bf16.gmra.mxu0 %v385
        %v452 = vpop.f32.mrf.mxu0
        %v453 = vadd.f32 %v308, %v452
        %v454 = vpop.f32.mrf.mxu0
        %v455 = vadd.f32 %v312, %v454
        %v456 = vpop.f32.mrf.mxu0
        %v457 = vadd.f32 %v308, %v456
        %v458 = vpop.f32.mrf.mxu0
        %v459 = vadd.f32 %v312, %v458
        %460 = vmatprep.mubr.bf16.mxu0 0
        %461 = vmatmul.mubr.bf16.gmra.mxu0 %v388
        %v462 = vpop.f32.mrf.mxu0
        %v463 = vadd.f32 %v308, %v462
        %v464 = vpop.f32.mrf.mxu0
        %v465 = vadd.f32 %v312, %v464
        %v466 = vpop.f32.mrf.mxu0
        %v467 = vadd.f32 %v308, %v466
        %v468 = vpop.f32.mrf.mxu0
        %v469 = vadd.f32 %v312, %v468
        %470 = vmatprep.mubr.bf16.mxu0 0
        %471 = vmatmul.mubr.bf16.gmra.mxu0 %v391
        %v472 = vpop.f32.mrf.mxu0
        %v473 = vadd.f32 %v308, %v472
        %v474 = vpop.f32.mrf.mxu0
        %v475 = vadd.f32 %v312, %v474
        %v476 = vpop.f32.mrf.mxu0
        %v477 = vadd.f32 %v308, %v476
        %v478 = vpop.f32.mrf.mxu0
        %v479 = vadd.f32 %v312, %v478
        %480 = vmatprep.mubr.bf16.mxu0 0
        %481 = vmatmul.mubr.bf16.gmra.mxu0 %v394
        %v482 = vpop.f32.mrf.mxu0
        %v483 = vadd.f32 %v308, %v482
        %v484 = vpop.f32.mrf.mxu0
        %v485 = vadd.f32 %v312, %v484
        %v486 = vpop.f32.mrf.mxu0
        %v487 = vadd.f32 %v308, %v486
        %v488 = vpop.f32.mrf.mxu0
        %v489 = vadd.f32 %v312, %v488
        %490 = vmatprep.mubr.bf16.mxu0 0
        %491 = vmatmul.mubr.bf16.gmra.mxu0 %v397
        %v492 = vpop.f32.mrf.mxu0
        %v493 = vadd.f32 %v308, %v492
        %v494 = vpop.f32.mrf.mxu0
        %v495 = vadd.f32 %v312, %v494
        %v496 = vpop.f32.mrf.mxu0
        %v497 = vadd.f32 %v308, %v496
        %v498 = vpop.f32.mrf.mxu0
        %v499 = vadd.f32 %v312, %v498
        %500 = vmatprep.mubr.bf16.mxu0 0
        %501 = vmatmul.mubr.bf16.gmra.mxu0 %v400
        %v502 = vpop.f32.mrf.mxu0
        %v503 = vadd.f32 %v308, %v502
        %v504 = vpop.f32.mrf.mxu0
        %v505 = vadd.f32 %v312, %v504
        %v506 = vpop.f32.mrf.mxu0
        %v507 = vadd.f32 %v308, %v506
        %v508 = vpop.f32.mrf.mxu0
        %v509 = vadd.f32 %v312, %v508
        %510 = vmatprep.mubr.bf16.mxu0 0
        %511 = vmatmul.mubr.bf16.gmra.mxu0 %v403
        %v512 = vpop.f32.mrf.mxu0
        %v513 = vadd.f32 %v308, %v512
        %v514 = vpop.f32.mrf.mxu0
        %v515 = vadd.f32 %v312, %v514
        %v516 = vpop.f32.mrf.mxu0
        %v517 = vadd.f32 %v308, %v516
        %v518 = vpop.f32.mrf.mxu0
        %v519 = vadd.f32 %v312, %v518
        %520 = vmatprep.mubr.bf16.mxu0 0
        %521 = vmatmul.mubr.bf16.gmra.mxu0 %v406
        %v522 = vpop.f32.mrf.mxu0
        %v523 = vadd.f32 %v308, %v522
        %v524 = vpop.f32.mrf.mxu0
        %v525 = vadd.f32 %v312, %v524
        %v526 = vpop.f32.mrf.mxu0
        %v527 = vadd.f32 %v308, %v526
        %v528 = vpop.f32.mrf.mxu0
        %v529 = vadd.f32 %v312, %v528
        %530 = vdwg.mxu0
        %v531 = vmul.f32 %v443, 0.2
        %v532 = vmul.f32 %v445, 0.2
        %v533 = vmul.f32 %v447, 0.2
        %v534 = vmul.f32 %v449, 0.2
        %v535 = vmul.f32 %v453, 0.2
        %v536 = vmul.f32 %v455, 0.2
        %v537 = vmul.f32 %v457, 0.2
        %v538 = vmul.f32 %v459, 0.2
        %v539 = vmul.f32 %v463, 0.2
        %v540 = vmul.f32 %v465, 0.2
        %v541 = vmul.f32 %v467, 0.2
        %v542 = vmul.f32 %v469, 0.2
        %v543 = vmul.f32 %v473, 0.2
        %v544 = vmul.f32 %v475, 0.2
        %v545 = vmul.f32 %v477, 0.2
        %v546 = vmul.f32 %v479, 0.2
        %v547 = vmul.f32 %v483, 0.2
        %v548 = vmul.f32 %v485, 0.2
        %v549 = vmul.f32 %v487, 0.2
        %v550 = vmul.f32 %v489, 0.2
        %v551 = vmul.f32 %v493, 0.2
        %v552 = vmul.f32 %v495, 0.2
        %v553 = vmul.f32 %v497, 0.2
        %v554 = vmul.f32 %v499, 0.2
        %v555 = vmul.f32 %v503, 0.2
        %v556 = vmul.f32 %v505, 0.2
        %v557 = vmul.f32 %v507, 0.2
        %v558 = vmul.f32 %v509, 0.2
        %v559 = vmul.f32 %v513, 0.2
        %v560 = vmul.f32 %v515, 0.2
        %v561 = vmul.f32 %v517, 0.2
        %v562 = vmul.f32 %v519, 0.2
        %v563 = vmul.f32 %v523, 0.2
        %v564 = vmul.f32 %v525, 0.2
        %v565 = vmul.f32 %v527, 0.2
        %v566 = vmul.f32 %v529, 0.2
        %v567 = vmax.f32 %v443, %v531
        %v568 = vmax.f32 %v445, %v532
        %v569 = vmax.f32 %v447, %v533
        %v570 = vmax.f32 %v449, %v534
        %v571 = vmax.f32 %v453, %v535
        %v572 = vmax.f32 %v455, %v536
        %v573 = vmax.f32 %v457, %v537
        %v574 = vmax.f32 %v459, %v538
        %v575 = vmax.f32 %v463, %v539
        %v576 = vmax.f32 %v465, %v540
        %v577 = vmax.f32 %v467, %v541
        %v578 = vmax.f32 %v469, %v542
        %v579 = vmax.f32 %v473, %v543
        %v580 = vmax.f32 %v475, %v544
        %v581 = vmax.f32 %v477, %v545
        %v582 = vmax.f32 %v479, %v546
        %v583 = vmax.f32 %v483, %v547
        %v584 = vmax.f32 %v485, %v548
        %v585 = vmax.f32 %v487, %v549
        %v586 = vmax.f32 %v489, %v550
        %v587 = vmax.f32 %v493, %v551
        %v588 = vmax.f32 %v495, %v552
        %v589 = vmax.f32 %v497, %v553
        %v590 = vmax.f32 %v499, %v554
        %v591 = vmax.f32 %v503, %v555
        %v592 = vmax.f32 %v505, %v556
        %v593 = vmax.f32 %v507, %v557
        %v594 = vmax.f32 %v509, %v558
        %v595 = vmax.f32 %v513, %v559
        %v596 = vmax.f32 %v515, %v560
        %v597 = vmax.f32 %v517, %v561
        %v598 = vmax.f32 %v519, %v562
        %v599 = vmax.f32 %v523, %v563
        %v600 = vmax.f32 %v525, %v564
        %v601 = vmax.f32 %v527, %v565
        %v602 = vmax.f32 %v529, %v566
        %v603 = vpack.c.bf16 %v569, %v567
        %v604 = vpack.c.bf16 %v570, %v568
        %v605 = vpack.c.bf16 %v573, %v571
        %v606 = vpack.c.bf16 %v574, %v572
        %v607 = vpack.c.bf16 %v577, %v575
        %v608 = vpack.c.bf16 %v578, %v576
        %v609 = vpack.c.bf16 %v581, %v579
        %v610 = vpack.c.bf16 %v582, %v580
        %v611 = vpack.c.bf16 %v585, %v583
        %v612 = vpack.c.bf16 %v586, %v584
        %v613 = vpack.c.bf16 %v589, %v587
        %v614 = vpack.c.bf16 %v590, %v588
        %v615 = vpack.c.bf16 %v593, %v591
        %v616 = vpack.c.bf16 %v594, %v592
        %v617 = vpack.c.bf16 %v597, %v595
        %v618 = vpack.c.bf16 %v598, %v596
        %v619 = vpack.c.bf16 %v601, %v599
        %v620 = vpack.c.bf16 %v602, %v600
        %v621 = vld [vmem:[%s3] sm:$0xf]
        %v622 = vld [vmem:[%s3 + $0x4] sm:$0xf]
        %v623 = vld [vmem:[%s3 + $0x8] sm:$0xf]
        %v624 = vld [vmem:[%s3 + $0xc] sm:$0xf]
        %v625 = vld [vmem:[%s3 + $0x10] sm:$0xf]
        %v626 = vld [vmem:[%s3 + $0x14] sm:$0xf]
        %v627 = vld [vmem:[%s3 + $0x18] sm:$0xf]
        %v628 = vld [vmem:[%s3 + $0x1c] sm:$0xf]
        %v629 = vld [vmem:[%s3 + $0x20] sm:$0xf]
        %v630 = vld [vmem:[%s3 + $0x24] sm:$0xf]
        %v631 = vld [vmem:[%s3 + $0x28] sm:$0xf]
        %v632 = vld [vmem:[%s3 + $0x2c] sm:$0xf]
        %v633 = vld [vmem:[%s3 + $0x30] sm:$0xf]
        %v634 = vld [vmem:[%s3 + $0x34] sm:$0xf]
        %v635 = vld [vmem:[%s3 + $0x38] sm:$0xf]
        %v636 = vld [vmem:[%s3 + $0x3c] sm:$0xf]
        %v637 = vld [vmem:[%s3 + $0x40] sm:$0xf]
        %v638 = vld [vmem:[%s3 + $0x44] sm:$0xf]
        %v639 = vld [vmem:[%s3 + $0x48] sm:$0xf]
        %v640 = vld [vmem:[%s3 + $0x4c] sm:$0xf]
        %v641 = vld [vmem:[%s3 + $0x50] sm:$0xf]
        %v642 = vld [vmem:[%s3 + $0x54] sm:$0xf]
        %v643 = vld [vmem:[%s3 + $0x58] sm:$0xf]
        %v644 = vld [vmem:[%s3 + $0x5c] sm:$0xf]
        %v645 = vld [vmem:[%s3 + $0x60] sm:$0xf]
        %v646 = vld [vmem:[%s3 + $0x64] sm:$0xf]
        %v647 = vld [vmem:[%s3 + $0x68] sm:$0xf]
        %v648 = vld [vmem:[%s3 + $0x6c] sm:$0xf]
        %v649 = vld [vmem:[%s3 + $0x70] sm:$0xf]
        %v650 = vld [vmem:[%s3 + $0x74] sm:$0xf]
        %v651 = vld [vmem:[%s3 + $0x78] sm:$0xf]
        %v652 = vld [vmem:[%s3 + $0x7c] sm:$0xf]
        %v653 = vld [vmem:[%s4] sm:$0x1]
        %v655 = vlaneseq
        %v656 = vshrl.u32 %v655, 7
        %v657 = vsub.s32 0, %v656
        %v658 = vrot.slane %v653, %v657
        %v692 = vunpack.c.l.b16 %v621
        %v693 = vunpack.c.l.b16 %v622
        %v694 = vunpack.c.l.b16 %v623
        %v695 = vunpack.c.l.b16 %v624
        %v696 = vunpack.c.l.b16 %v625
        %v697 = vunpack.c.l.b16 %v626
        %v698 = vunpack.c.l.b16 %v627
        %v699 = vunpack.c.l.b16 %v628
        %v700 = vunpack.c.l.b16 %v629
        %v701 = vunpack.c.l.b16 %v630
        %v702 = vunpack.c.l.b16 %v631
        %v703 = vunpack.c.l.b16 %v632
        %v704 = vunpack.c.l.b16 %v633
        %v705 = vunpack.c.l.b16 %v634
        %v706 = vunpack.c.l.b16 %v635
        %v707 = vunpack.c.l.b16 %v636
        %v708 = vunpack.c.l.b16 %v637
        %v709 = vunpack.c.l.b16 %v638
        %v710 = vunpack.c.l.b16 %v639
        %v711 = vunpack.c.l.b16 %v640
        %v712 = vunpack.c.l.b16 %v641
        %v713 = vunpack.c.l.b16 %v642
        %v714 = vunpack.c.l.b16 %v643
        %v715 = vunpack.c.l.b16 %v644
        %v716 = vunpack.c.l.b16 %v645
        %v717 = vunpack.c.l.b16 %v646
        %v718 = vunpack.c.l.b16 %v647
        %v719 = vunpack.c.l.b16 %v648
        %v720 = vunpack.c.l.b16 %v649
        %v721 = vunpack.c.l.b16 %v650
        %v722 = vunpack.c.l.b16 %v651
        %v723 = vunpack.c.l.b16 %v652
        %v724 = vpack.c.b16 %v693, %v692
        %v725 = vpack.c.b16 %v695, %v694
        %v726 = vpack.c.b16 %v697, %v696
        %v727 = vpack.c.b16 %v699, %v698
        %v728 = vpack.c.b16 %v701, %v700
        %v729 = vpack.c.b16 %v703, %v702
        %v730 = vpack.c.b16 %v705, %v704
        %v731 = vpack.c.b16 %v707, %v706
        %v732 = vpack.c.b16 %v709, %v708
        %v733 = vpack.c.b16 %v711, %v710
        %v734 = vpack.c.b16 %v713, %v712
        %v735 = vpack.c.b16 %v715, %v714
        %v736 = vpack.c.b16 %v717, %v716
        %v737 = vpack.c.b16 %v719, %v718
        %v738 = vpack.c.b16 %v721, %v720
        %v739 = vpack.c.b16 %v723, %v722
        %756 = vmatprep.subr.bf16.mxu0 0
        %757 = vmatpush1.bf16.msra.mxu0 %v731
        %758 = vmatprep.subr.bf16.mxu0 0
        %759 = vmatpush1.bf16.msra.mxu0 %v730
        %760 = vmatprep.subr.bf16.mxu0 0
        %761 = vmatpush1.bf16.msra.mxu0 %v729
        %762 = vmatprep.subr.bf16.mxu0 0
        %763 = vmatpush1.bf16.msra.mxu0 %v728
        %764 = vmatprep.subr.bf16.mxu0 0
        %765 = vmatpush1.bf16.msra.mxu0 %v727
        %766 = vmatprep.subr.bf16.mxu0 0
        %767 = vmatpush1.bf16.msra.mxu0 %v726
        %768 = vmatprep.subr.bf16.mxu0 0
        %769 = vmatpush1.bf16.msra.mxu0 %v725
        %770 = vmatprep.subr.bf16.mxu0 0
        %771 = vmatpush1.bf16.msra.mxu0 %v724
        %772 = vmatprep.subr.bf16.mxu0 0
        %773 = vmatpush2.bf16.msra.mxu0 %v739
        %774 = vmatprep.subr.bf16.mxu0 0
        %775 = vmatpush2.bf16.msra.mxu0 %v738
        %776 = vmatprep.subr.bf16.mxu0 0
        %777 = vmatpush2.bf16.msra.mxu0 %v737
        %778 = vmatprep.subr.bf16.mxu0 0
        %779 = vmatpush2.bf16.msra.mxu0 %v736
        %780 = vmatprep.subr.bf16.mxu0 0
        %781 = vmatpush2.bf16.msra.mxu0 %v735
        %782 = vmatprep.subr.bf16.mxu0 0
        %783 = vmatpush2.bf16.msra.mxu0 %v734
        %784 = vmatprep.subr.bf16.mxu0 0
        %785 = vmatpush2.bf16.msra.mxu0 %v733
        %786 = vmatprep.subr.bf16.mxu0 0
        %787 = vmatpush2.bf16.msra.mxu0 %v732
        %788 = vmatprep.mubr.bf16.mxu0 %v604
        %789 = vmatmul.mubr.bf16.gmra.mxu0 %v603
        %v790 = vpop.f32.mrf.mxu0
        %v791 = vadd.f32 %v658, %v790
        %v792 = vpop.f32.mrf.mxu0
        %v793 = vpop.f32.mrf.mxu0
        %v794 = vadd.f32 %v658, %v793
        %v795 = vpop.f32.mrf.mxu0
        %796 = vmatprep.mubr.bf16.mxu0 %v606
        %797 = vmatmul.mubr.bf16.gmra.mxu0 %v605
        %v798 = vpop.f32.mrf.mxu0
        %v799 = vadd.f32 %v658, %v798
        %v800 = vpop.f32.mrf.mxu0
        %v801 = vpop.f32.mrf.mxu0
        %v802 = vadd.f32 %v658, %v801
        %v803 = vpop.f32.mrf.mxu0
        %804 = vmatprep.mubr.bf16.mxu0 %v608
        %805 = vmatmul.mubr.bf16.gmra.mxu0 %v607
        %v806 = vpop.f32.mrf.mxu0
        %v807 = vadd.f32 %v658, %v806
        %v808 = vpop.f32.mrf.mxu0
        %v809 = vpop.f32.mrf.mxu0
        %v810 = vadd.f32 %v658, %v809
        %v811 = vpop.f32.mrf.mxu0
        %812 = vmatprep.mubr.bf16.mxu0 %v610
        %813 = vmatmul.mubr.bf16.gmra.mxu0 %v609
        %v814 = vpop.f32.mrf.mxu0
        %v815 = vadd.f32 %v658, %v814
        %v816 = vpop.f32.mrf.mxu0
        %v817 = vpop.f32.mrf.mxu0
        %v818 = vadd.f32 %v658, %v817
        %v819 = vpop.f32.mrf.mxu0
        %820 = vmatprep.mubr.bf16.mxu0 %v612
        %821 = vmatmul.mubr.bf16.gmra.mxu0 %v611
        %v822 = vpop.f32.mrf.mxu0
        %v823 = vadd.f32 %v658, %v822
        %v824 = vpop.f32.mrf.mxu0
        %v825 = vpop.f32.mrf.mxu0
        %v826 = vadd.f32 %v658, %v825
        %v827 = vpop.f32.mrf.mxu0
        %828 = vmatprep.mubr.bf16.mxu0 %v614
        %829 = vmatmul.mubr.bf16.gmra.mxu0 %v613
        %v830 = vpop.f32.mrf.mxu0
        %v831 = vadd.f32 %v658, %v830
        %v832 = vpop.f32.mrf.mxu0
        %v833 = vpop.f32.mrf.mxu0
        %v834 = vadd.f32 %v658, %v833
        %v835 = vpop.f32.mrf.mxu0
        %836 = vmatprep.mubr.bf16.mxu0 %v616
        %837 = vmatmul.mubr.bf16.gmra.mxu0 %v615
        %v838 = vpop.f32.mrf.mxu0
        %v839 = vadd.f32 %v658, %v838
        %v840 = vpop.f32.mrf.mxu0
        %v841 = vpop.f32.mrf.mxu0
        %v842 = vadd.f32 %v658, %v841
        %v843 = vpop.f32.mrf.mxu0
        %844 = vmatprep.mubr.bf16.mxu0 %v618
        %845 = vmatmul.mubr.bf16.gmra.mxu0 %v617
        %v846 = vpop.f32.mrf.mxu0
        %v847 = vadd.f32 %v658, %v846
        %v848 = vpop.f32.mrf.mxu0
        %v849 = vpop.f32.mrf.mxu0
        %v850 = vadd.f32 %v658, %v849
        %v851 = vpop.f32.mrf.mxu0
        %852 = vmatprep.mubr.bf16.mxu0 %v620
        %853 = vmatmul.mubr.bf16.gmra.mxu0 %v619
        %v854 = vpop.f32.mrf.mxu0
        %v855 = vadd.f32 %v658, %v854
        %v856 = vpop.f32.mrf.mxu0
        %v857 = vpop.f32.mrf.mxu0
        %v858 = vadd.f32 %v658, %v857
        %v859 = vpop.f32.mrf.mxu0
        %860 = vdwg.mxu0
        %v861 = vmul.f32 %v791, 0.2
        %v862 = vmul.f32 %v794, 0.2
        %v863 = vmul.f32 %v799, 0.2
        %v864 = vmul.f32 %v802, 0.2
        %v865 = vmul.f32 %v807, 0.2
        %v866 = vmul.f32 %v810, 0.2
        %v867 = vmul.f32 %v815, 0.2
        %v868 = vmul.f32 %v818, 0.2
        %v869 = vmul.f32 %v823, 0.2
        %v870 = vmul.f32 %v826, 0.2
        %v871 = vmul.f32 %v831, 0.2
        %v872 = vmul.f32 %v834, 0.2
        %v873 = vmul.f32 %v839, 0.2
        %v874 = vmul.f32 %v842, 0.2
        %v875 = vmul.f32 %v847, 0.2
        %v876 = vmul.f32 %v850, 0.2
        %v877 = vmul.f32 %v855, 0.2
        %v878 = vmul.f32 %v858, 0.2
        %v879 = vmax.f32 %v791, %v861
        %v880 = vmax.f32 %v794, %v862
        %v881 = vmax.f32 %v799, %v863
        %v882 = vmax.f32 %v802, %v864
        %v883 = vmax.f32 %v807, %v865
        %v884 = vmax.f32 %v810, %v866
        %v885 = vmax.f32 %v815, %v867
        %v886 = vmax.f32 %v818, %v868
        %v887 = vmax.f32 %v823, %v869
        %v888 = vmax.f32 %v826, %v870
        %v889 = vmax.f32 %v831, %v871
        %v890 = vmax.f32 %v834, %v872
        %v891 = vmax.f32 %v839, %v873
        %v892 = vmax.f32 %v842, %v874
        %v893 = vmax.f32 %v847, %v875
        %v894 = vmax.f32 %v850, %v876
        %v895 = vmax.f32 %v855, %v877
        %v896 = vmax.f32 %v858, %v878
        %v897 = vld [vmem:[%s5] sm:$0x1]
        %v898 = vpack.c.bf16 %v880, %v879
        %v899 = vpack.c.bf16 %v882, %v881
        %v900 = vpack.c.bf16 %v884, %v883
        %v901 = vpack.c.bf16 %v886, %v885
        %v902 = vpack.c.bf16 %v888, %v887
        %v903 = vpack.c.bf16 %v890, %v889
        %v904 = vpack.c.bf16 %v892, %v891
        %v905 = vpack.c.bf16 %v894, %v893
        %v906 = vpack.c.bf16 %v896, %v895
        %s907 = sld [smem:[#allocation2]]
        %v908 = vstv %s907
        %909 = vmatprep.subr.bf16.mxu0 0
        %910 = vmatpush1.bf16.xpose.msra.mxu0 %v905
        %911 = vmatprep.subr.bf16.mxu0 0
        %912 = vmatpush1.bf16.xpose.msra.mxu0 %v904
        %913 = vmatprep.subr.bf16.mxu0 0
        %914 = vmatpush1.bf16.xpose.msra.mxu0 %v903
        %915 = vmatprep.subr.bf16.mxu0 0
        %916 = vmatpush1.bf16.xpose.msra.mxu0 %v902
        %917 = vmatprep.subr.bf16.mxu0 0
        %918 = vmatpush1.bf16.xpose.msra.mxu0 %v901
        %919 = vmatprep.subr.bf16.mxu0 0
        %920 = vmatpush1.bf16.xpose.msra.mxu0 %v900
        %921 = vmatprep.subr.bf16.mxu0 0
        %922 = vmatpush1.bf16.xpose.msra.mxu0 %v899
        %923 = vmatprep.subr.bf16.mxu0 0
        %924 = vmatpush1.bf16.xpose.msra.mxu0 %v898
        %925 = vmatprep.subr.bf16.mxu0 0
        %926 = vmatpush2.bf16.xpose.msra.mxu0 0
        %927 = vmatprep.subr.bf16.mxu0 0
        %928 = vmatpush2.bf16.xpose.msra.mxu0 0
        %929 = vmatprep.subr.bf16.mxu0 0
        %930 = vmatpush2.bf16.xpose.msra.mxu0 0
        %931 = vmatprep.subr.bf16.mxu0 0
        %932 = vmatpush2.bf16.xpose.msra.mxu0 0
        %933 = vmatprep.subr.bf16.mxu0 0
        %934 = vmatpush2.bf16.xpose.msra.mxu0 0
        %935 = vmatprep.subr.bf16.mxu0 0
        %936 = vmatpush2.bf16.xpose.msra.mxu0 0
        %937 = vmatprep.subr.bf16.mxu0 0
        %938 = vmatpush2.bf16.xpose.msra.mxu0 0
        %939 = vmatprep.subr.bf16.mxu0 0
        %940 = vmatpush2.bf16.xpose.msra.mxu0 %v906
        %941 = vmatprep.mubr.bf16.mxu0 0
        %942 = vmatmul.mubr.bf16.gmra.mxu0 %v897
        %v943 = vpop.f32.mrf.mxu0
        %v944 = vadd.f32 %v908, %v943
        %v945 = vpop.f32.mrf.mxu0
        %v946 = vadd.f32 %v908, %v945
        %v947 = vpop.f32.mrf.mxu0
        %v948 = vpop.f32.mrf.mxu0
        %949 = vdwg.mxu0
        %v950 = vsub.f32 0.0, %v944
        %v951 = vsub.f32 0.0, %v946
        %v952 = vmul.f32 %v950, 1.442695
        %v953 = vpow.pop %v952
        %v954 = vmul.f32 %v951, 1.442695
        %v955 = vpow.pop %v954
        %v956 = vadd.f32 %v953, 1.0
        %v957 = vadd.f32 %v955, 1.0
        %v958 = vrcp.pop %v956
        %v959 = vrcp.pop %v957
        %v962 = vcombine.low %v958, %v959
        %v964 = vunpack.c.l.s4 1966171168
        %v965 = vunpack.c.0.s8 %v964
        %v966 = vlaneseq
        %v967 = vshrl.u32 %v966, 7
        %v968 = vsub.s32 %v965, %v967
        %v969 = vrot.slane %v962, %v968
        %v971 = vunpack.c.l.s4 1966171168
        %v972 = vunpack.c.0.s8 %v971
        %v973 = vlaneseq
        %v974 = vshrl.u32 %v973, 7
        %v975 = vsub.s32 %v972, %v974
        %v976 = vrot.slane %v969, %v975
        %v978 = vlaneseq
        %vm979 = vcmp.ge.s32.totalorder %v978, 0
        %vm980 = vcmp.lt.s32.totalorder %v978, 144
        %vm981 = vmand %vm979, %vm980
        %982 = vst.msk [vmem:[%s273] sm:$0x3] %vm981, %v976
        %s983 = sand.u32 %s182, 1
        %s984 = scalar_lea.sflag [#allocation4], %s983
        %s985 = sand.u32 %s182, 1
        %s986 = smul.addr %s985, 2
        %s987 = scalar_lea.vmem [#allocation3], %s986
        // Predicated region
        $region49: #{tpu_custom_call.1} parent=47 // pred_check
          %p988 = pneg %p192
        $region50: #{tpu_custom_call.1} parent=47 // pred_check_branch
          %990 = sbr.rel (%p988) target = $region52
        $region51: #{tpu_custom_call.1} parent=47 // pred_region
          %s992 = ssub.s32 32, 32
          %993 = vsyncadd %s984, %s992
          %s994 = smul.addr %s22, 2
          %s995 = smul.addr %s994, 16
          %s996 = scalar_lea.hbm %s7, %s995
          %s998 = sshll.u32 %s987, 4
          %s999 = int_to_ptr.vmem [resolvable:$true] %s998
          %1001 = dma.vmem_to_hbm [thread:$0]  %s999, 32, %s996, %s984
        $region52: #{tpu_custom_call.1} parent=47 // pred_fallthru
          _
      $region48: #{tpu_custom_call.1} parent=5 // pred_fallthru
        _
      %p1002 = scmp.le.s32.totalorder 2, %s17
      // Predicated region
      $region53: #{tpu_custom_call.1} parent=5 // pred_check
        %p1003 = pneg %p1002
      $region54: #{tpu_custom_call.1} parent=5 // pred_check_branch
        %1005 = sbr.rel (%p1003) target = $region56
      $region55: #{tpu_custom_call.1} parent=5 // pred_region
        %s1006 = ssub.s32 %s17, 2
        // Predicated region
        $region57: #{tpu_custom_call.1} parent=55 // pred_check
          %p1007 = pneg %p198
        $region58: #{tpu_custom_call.1} parent=55 // pred_check_branch
          %1009 = sbr.rel (%p1007) target = $region60
        $region59: #{tpu_custom_call.1} parent=55 // pred_region
          %s1010 = sand.u32 %s183, 1
          %s1011 = scalar_lea.sflag [#allocation4], %s1010
          %s1012 = sand.u32 %s183, 1
          %s1013 = smul.addr %s1012, 2
          %s1014 = scalar_lea.vmem [#allocation3], %s1013
          %1015 = dma.done %s1011, 32
        $region60: #{tpu_custom_call.1} parent=55 // pred_fallthru
          _
      $region56: #{tpu_custom_call.1} parent=5 // pred_fallthru
        _
    $region6: #{tpu_custom_call.1} parent=1 // loop_footer
      %s21 = sadd.s32 1, %s17
    $region7: #{tpu_custom_call.1} parent=1 // loop_footer_branch
      %16 = sbr.rel target = $region3
    $region8: #{tpu_custom_call.1} parent=1 // loop_exit
      _
    %1016 = vsyncpa [#allocation4], 1
    %s1017 = scalar_lea.sflag [#allocation4], 1
    %1018 = vsyncpa %s1017, 1

</llo_original>
